<compile_context>
chip_gen: v7x
topology: tpu7x:2x2x1
jax: 0.10.0
libtpu: 0.0.40
codegen_flags: <defaults>
</compile_context>

<pallas_src>
import functools

import jax
import jax.numpy as jnp
from jax.experimental import pallas as pl
from jax.experimental.pallas import tpu as pltpu


def _iou_kernel(dt_ref, gt_ref, out_ref):
    # dt_ref:  (TN, 4)  block of detection boxes (x1, y1, x2, y2)
    # gt_ref:  (8, TM)  gt block: rows 0-3 coords (transposed), row 4 area, 5-7 zero
    # out_ref: (TN, TM) pairwise IoU block
    a = dt_ref[...].astype(jnp.float32)        # (TN, 4)
    g = gt_ref[...].astype(jnp.float32)        # (8, TM)

    ax1 = a[:, 0:1]
    ay1 = a[:, 1:2]
    ax2 = a[:, 2:3]
    ay2 = a[:, 3:4]                            # (TN, 1)

    bx1 = g[0:1, :]
    by1 = g[1:2, :]
    bx2 = g[2:3, :]
    by2 = g[3:4, :]                            # (1, TM)
    area_b = g[4:5, :]                         # (1, TM) precomputed host-side

    area_a = (ax2 - ax1) * (ay2 - ay1)         # (TN, 1)

    w_int = jnp.minimum(ax2, bx2) - jnp.maximum(ax1, bx1)   # (TN, TM)
    h_int = jnp.minimum(ay2, by2) - jnp.maximum(ay1, by1)   # (TN, TM)
    w_int = jnp.maximum(w_int, 0.0)
    h_int = jnp.maximum(h_int, 0.0)

    inter = w_int * h_int
    union = area_a + area_b - inter
    union = jnp.maximum(union, 1e-8)           # torch.clamp(union, min=1e-8)

    # EUP approximate reciprocal + one Newton-Raphson step: keeps the divide off
    # the (binding) VALU path on v6e/v7x while staying within 1e-5 of torch.
    r = pl.reciprocal(union, approx=True)
    r = r * (2.0 - union * r)
    out_ref[...] = (inter * r).astype(out_ref.dtype)


def _round_up(x, m):
    return (x + m - 1) // m * m


@functools.partial(jax.jit, static_argnames=("tile_n", "tile_m", "out_dtype"))
def pairwise_iou(dt, gt, *, tile_n=512, tile_m=2048, out_dtype=jnp.float32):
    """Pairwise IoU between dt [N,4] and gt [M,4] boxes (x1y1x2y2). Returns [N,M]."""
    assert dt.ndim == 2 and dt.shape[1] == 4
    assert gt.ndim == 2 and gt.shape[1] == 4
    n, m = dt.shape[0], gt.shape[0]

    # Tile sizes forced onto the (8, 128) grid (robust against odd user tiles),
    # clipped to the problem size so tiny inputs don't over-pad.
    tn = _round_up(min(tile_n, max(n, 1)), 8)
    tm = _round_up(min(tile_m, max(m, 1)), 128)
    n_pad = _round_up(max(n, tn), tn)
    m_pad = _round_up(max(m, tm), tm)

    dt_f = dt.astype(jnp.float32)
    if n_pad != n:
        # Padded rows are zero boxes -> IoU 0; sliced off below, never consumed.
        dt_f = jnp.pad(dt_f, ((0, n_pad - n), (0, 0)))

    # gt transposed onto lanes + area folded in as row 4, padded to 8 sublanes.
    gt_f = gt.astype(jnp.float32)
    area_b = ((gt_f[:, 2] - gt_f[:, 0]) * (gt_f[:, 3] - gt_f[:, 1]))[None, :]  # (1, M)
    gt_aug = jnp.concatenate(
        [gt_f.T, area_b, jnp.zeros((3, m), jnp.float32)], axis=0)              # (8, M)
    if m_pad != m:
        gt_aug = jnp.pad(gt_aug, ((0, 0), (0, m_pad - m)))

    n_tiles = n_pad // tn
    m_tiles = m_pad // tm

    # Put the axis with more tiles outermost so megacore sharding (v7x) always
    # has work to split; on single-core chips the ordering is neutral.
    if n_tiles >= m_tiles:
        grid = (n_tiles, m_tiles)
        dt_spec = pl.BlockSpec((tn, 4), lambda i, j: (i, 0))
        gt_spec = pl.BlockSpec((8, tm), lambda i, j: (0, j))
        out_spec = pl.BlockSpec((tn, tm), lambda i, j: (i, j))
    else:
        grid = (m_tiles, n_tiles)
        dt_spec = pl.BlockSpec((tn, 4), lambda i, j: (j, 0))
        gt_spec = pl.BlockSpec((8, tm), lambda i, j: (0, i))
        out_spec = pl.BlockSpec((tn, tm), lambda i, j: (j, i))

    out = pl.pallas_call(
        _iou_kernel,
        out_shape=jax.ShapeDtypeStruct((n_pad, m_pad), out_dtype),
        grid_spec=pltpu.PrefetchScalarGridSpec(
            num_scalar_prefetch=0,
            grid=grid,
            in_specs=[dt_spec, gt_spec],
            out_specs=out_spec,
        ),
        compiler_params=pltpu.CompilerParams(
            dimension_semantics=("parallel", "parallel"),
            # Default 512x2048 tiles need ~9 MiB double-buffered; 32 MiB scoped
            # limit is safe on every generation, including v7x's 64 MiB VMEM.
            vmem_limit_bytes=32 << 20,
        ),
    )(dt_f, gt_aug)

    if n_pad == n and m_pad == m:
        return out
    return out[:n, :m]


def _iou_reference(dt, gt):
    """Plain-JAX mirror of the PyTorch _iou_a path (x1y1x2y2, ioutype='iou')."""
    a = dt.astype(jnp.float32)
    b = gt.astype(jnp.float32)
    area = (b[:, 2] - b[:, 0]) * (b[:, 3] - b[:, 1])
    w_int = jnp.minimum(a[:, 2][:, None], b[:, 2]) - jnp.maximum(a[:, 0][:, None], b[:, 0])
    h_int = jnp.minimum(a[:, 3][:, None], b[:, 3]) - jnp.maximum(a[:, 1][:, None], b[:, 1])
    w_int = jnp.maximum(w_int, 0.0)
    h_int = jnp.maximum(h_int, 0.0)
    inter = w_int * h_int
    union = ((a[:, 2] - a[:, 0]) * (a[:, 3] - a[:, 1]))[:, None] + area - inter
    union = jnp.maximum(union, 1e-8)
    return inter / union


def _make_boxes(key, n):
    k1, k2 = jax.random.split(key)
    xy = jax.random.uniform(k1, (n, 2), jnp.float32, 0.0, 10.0)
    wh = jax.random.uniform(k2, (n, 2), jnp.float32, 1.0, 6.0)
    return jnp.concatenate([xy, xy + wh], axis=1)   # valid x1y1x2y2


if __name__ == "__main__":
    key = jax.random.PRNGKey(0)
    k1, k2, k3, k4 = jax.random.split(key, 4)

    # Small deterministic example: 8 detection boxes, 8 gt boxes (x1y1x2y2).
    n, m = 8, 8
    dt = _make_boxes(k1, n)
    gt = _make_boxes(k2, m)

    out = pairwise_iou(dt, gt)
    out = jax.block_until_ready(out)
    ref = _iou_reference(dt, gt)
    assert out.shape == (n, m), out.shape
    assert jnp.allclose(out, ref, atol=1e-5, rtol=1e-5), (
        "mismatch vs reference",
        float(jnp.max(jnp.abs(out - ref))),
    )

    # Non-aligned shapes with small tiles: exercises the 2-D grid (both grid
    # orderings reachable), the (8,128) tile-rounding, and padding/slicing.
    n2, m2 = 40, 200
    dt2 = _make_boxes(k3, n2)
    gt2 = _make_boxes(k4, m2)
    out2 = pairwise_iou(dt2, gt2, tile_n=16, tile_m=128)
    out2 = jax.block_until_ready(out2)
    ref2 = _iou_reference(dt2, gt2)
    assert out2.shape == (n2, m2), out2.shape
    assert jnp.allclose(out2, ref2, atol=1e-5, rtol=1e-5), (
        "mismatch vs reference (tiled)",
        float(jnp.max(jnp.abs(out2 - ref2))),
    )

    # Odd user tile (not a multiple of 8/128) must be rounded up, not rejected.
    out3 = pairwise_iou(dt2, gt2, tile_n=100, tile_m=200)
    out3 = jax.block_until_ready(out3)
    assert out3.shape == (n2, m2), out3.shape
    assert jnp.allclose(out3, ref2, atol=1e-5, rtol=1e-5), (
        "mismatch vs reference (odd tiles)",
        float(jnp.max(jnp.abs(out3 - ref2))),
    )

    # bf16 output mode (v5e writeback-bound option): math stays f32, store bf16.
    out_bf16 = pairwise_iou(dt, gt, out_dtype=jnp.bfloat16)
    out_bf16 = jax.block_until_ready(out_bf16)
    assert out_bf16.dtype == jnp.bfloat16
    assert jnp.allclose(out_bf16.astype(jnp.float32), ref, atol=1e-2, rtol=1e-2), (
        "mismatch vs reference (bf16 out)",
        float(jnp.max(jnp.abs(out_bf16.astype(jnp.float32) - ref))),
    )

    # TODO(synk): _giou in the PyTorch module is an unfinished stub (returns None);
    # only ioutype='iou' semantics are implemented here.
    print("KERNEL_OK")
</pallas_src>

<mosaic_0001>
module attributes {stable_mosaic.version = 11 : i64} {
  func.func @_iou_kernel(%arg0: i32, %arg1: i32, %arg2: memref<8x4xf32, #tpu.memory_space<vmem>>, %arg3: memref<8x128xf32, #tpu.memory_space<vmem>>, %arg4: memref<8x128xf32, #tpu.memory_space<vmem>>) attributes {dimension_semantics = [#tpu.dimension_semantics<parallel>, #tpu.dimension_semantics<parallel>], iteration_bounds = array<i64: 1, 1>, scalar_prefetch = 0 : i64, scratch_operands = 0 : i64, tpu.core_type = #tpu.core_type<tc>, window_params = [{transform_indices = @transform_0, window_bounds = array<i64: 8, 4>}, {transform_indices = @transform_1, window_bounds = array<i64: 8, 128>}, {transform_indices = @transform_2, window_bounds = array<i64: 8, 128>}]} {
    %c0 = arith.constant 0 : index
    %c0_0 = arith.constant 0 : index
    %0 = vector.load %arg2[%c0, %c0_0] : memref<8x4xf32, #tpu.memory_space<vmem>>, vector<8x4xf32>
    %c0_1 = arith.constant 0 : index
    %c0_2 = arith.constant 0 : index
    %1 = vector.load %arg3[%c0_1, %c0_2] : memref<8x128xf32, #tpu.memory_space<vmem>>, vector<8x128xf32>
    %2 = vector.extract_strided_slice %0 {offsets = [0, 0], sizes = [8, 1], strides = [1, 1]} : vector<8x4xf32> to vector<8x1xf32>
    %3 = vector.extract_strided_slice %0 {offsets = [0, 1], sizes = [8, 1], strides = [1, 1]} : vector<8x4xf32> to vector<8x1xf32>
    %4 = vector.extract_strided_slice %0 {offsets = [0, 2], sizes = [8, 1], strides = [1, 1]} : vector<8x4xf32> to vector<8x1xf32>
    %5 = vector.extract_strided_slice %0 {offsets = [0, 3], sizes = [8, 1], strides = [1, 1]} : vector<8x4xf32> to vector<8x1xf32>
    %6 = vector.extract_strided_slice %1 {offsets = [0, 0], sizes = [1, 128], strides = [1, 1]} : vector<8x128xf32> to vector<1x128xf32>
    %7 = vector.extract_strided_slice %1 {offsets = [1, 0], sizes = [1, 128], strides = [1, 1]} : vector<8x128xf32> to vector<1x128xf32>
    %8 = vector.extract_strided_slice %1 {offsets = [2, 0], sizes = [1, 128], strides = [1, 1]} : vector<8x128xf32> to vector<1x128xf32>
    %9 = vector.extract_strided_slice %1 {offsets = [3, 0], sizes = [1, 128], strides = [1, 1]} : vector<8x128xf32> to vector<1x128xf32>
    %10 = vector.extract_strided_slice %1 {offsets = [4, 0], sizes = [1, 128], strides = [1, 1]} : vector<8x128xf32> to vector<1x128xf32>
    %11 = arith.subf %4, %2 : vector<8x1xf32>
    %12 = arith.subf %5, %3 : vector<8x1xf32>
    %13 = arith.mulf %11, %12 : vector<8x1xf32>
    %14 = vector.broadcast %4 : vector<8x1xf32> to vector<8x128xf32>
    %15 = vector.broadcast %8 : vector<1x128xf32> to vector<8x128xf32>
    %16 = arith.minimumf %14, %15 : vector<8x128xf32>
    %17 = vector.broadcast %2 : vector<8x1xf32> to vector<8x128xf32>
    %18 = vector.broadcast %6 : vector<1x128xf32> to vector<8x128xf32>
    %19 = arith.maximumf %17, %18 : vector<8x128xf32>
    %20 = arith.subf %16, %19 : vector<8x128xf32>
    %21 = vector.broadcast %5 : vector<8x1xf32> to vector<8x128xf32>
    %22 = vector.broadcast %9 : vector<1x128xf32> to vector<8x128xf32>
    %23 = arith.minimumf %21, %22 : vector<8x128xf32>
    %24 = vector.broadcast %3 : vector<8x1xf32> to vector<8x128xf32>
    %25 = vector.broadcast %7 : vector<1x128xf32> to vector<8x128xf32>
    %26 = arith.maximumf %24, %25 : vector<8x128xf32>
    %27 = arith.subf %23, %26 : vector<8x128xf32>
    %cst = arith.constant 0.000000e+00 : f32
    %28 = vector.broadcast %cst : f32 to vector<8x128xf32>
    %29 = arith.maximumf %20, %28 : vector<8x128xf32>
    %cst_3 = arith.constant 0.000000e+00 : f32
    %30 = vector.broadcast %cst_3 : f32 to vector<8x128xf32>
    %31 = arith.maximumf %27, %30 : vector<8x128xf32>
    %32 = arith.mulf %29, %31 : vector<8x128xf32>
    %33 = vector.broadcast %13 : vector<8x1xf32> to vector<8x128xf32>
    %34 = vector.broadcast %10 : vector<1x128xf32> to vector<8x128xf32>
    %35 = arith.addf %33, %34 : vector<8x128xf32>
    %36 = arith.subf %35, %32 : vector<8x128xf32>
    %cst_4 = arith.constant 9.99999993E-9 : f32
    %37 = vector.broadcast %cst_4 : f32 to vector<8x128xf32>
    %38 = arith.maximumf %36, %37 : vector<8x128xf32>
    %39 = tpu.reciprocal %38 {approx = true} : vector<8x128xf32> -> vector<8x128xf32>
    %40 = arith.mulf %38, %39 : vector<8x128xf32>
    %cst_5 = arith.constant 2.000000e+00 : f32
    %41 = vector.broadcast %cst_5 : f32 to vector<8x128xf32>
    %42 = arith.subf %41, %40 : vector<8x128xf32>
    %43 = arith.mulf %39, %42 : vector<8x128xf32>
    %44 = arith.mulf %32, %43 : vector<8x128xf32>
    %c0_6 = arith.constant 0 : index
    %c0_7 = arith.constant 0 : index
    %45 = vector.load %arg4[%c0_6, %c0_7] : memref<8x128xf32, #tpu.memory_space<vmem>>, vector<8x128xf32>
    tpu.vector_store %arg4[%c0_6, %c0_7], %44 {strides = array<i32>} : memref<8x128xf32, #tpu.memory_space<vmem>>, vector<8x128xf32>,
    return
  }
  func.func @transform_0(%arg0: i32, %arg1: i32) -> (i32, i32) {
    %c0_i32 = arith.constant 0 : i32
    %c0_i32_0 = arith.constant 0 : i32
    return %arg0, %c0_i32 : i32, i32
  }
  func.func @transform_1(%arg0: i32, %arg1: i32) -> (i32, i32) {
    %c0_i32 = arith.constant 0 : i32
    %c0_i32_0 = arith.constant 0 : i32
    return %c0_i32, %arg1 : i32, i32
  }
  func.func @transform_2(%arg0: i32, %arg1: i32) -> (i32, i32) {
    %c0_i32 = arith.constant 0 : i32
    return %arg0, %arg1 : i32, i32
  }
}

</mosaic_0001>

<llo_original>
// kernel: pairwise_iou.1
$region0: #{pairwise_iou.1}
  #allocation0 [shape = 'u32[]', space=smem, size = 0x4, offset = 0x4, fixed_abs, tag = 'smem constant byte address 0x4 - core index']
  #allocation1 [shape = 'u32[144,128]{1,0:T(1,128)}', space=vmem, size = 0x12000, scoped, tag = 'internal scratch']
  %s0 = inlined_call_operand.vmem [shape: f32[8,4], index: 0, kind: input, shape index: {}]
  %s1 = inlined_call_operand.vmem [shape: f32[8,128], index: 1, kind: input, shape index: {}]
  %s2 = inlined_call_operand.hbm [shape: f32[8,128], index: 2, kind: output, shape index: {}]
  %s3 = sld [smem:[#allocation0]]
  $region18: #{pairwise_iou.1} parent=0
    _
  %s5 = ssub.s32 1, %s3
  %s6 = scalar_select 0, %s5, %s3
  $region1: #{pairwise_iou.1} parent=0
    #allocation2 [shape = 'u8[4096]{0}', space=vmem, size = 0x1000, scoped, tag = 'output window, operand 0, single buffered']
    #allocation3 [shape = 's32[1]{0}', space=sflag, size = 0x4, scoped, tag = 'scoped memory for pairwise_iou.1']
    %7 = vsyncpa [#allocation3], 0
    // Predicated region
    $region2: #{pairwise_iou.1} parent=1 // pred_check
      _
    $region3: #{pairwise_iou.1} parent=1 // pred_check_branch
      %9 = sbr.rel (0) target = $region5
    $region4: #{pairwise_iou.1} parent=1 // pred_region
      _
    $region5: #{pairwise_iou.1} parent=1 // pred_fallthru
      _
    // Predicated region
    $region6: #{pairwise_iou.1} parent=1 // pred_check
      _
    $region7: #{pairwise_iou.1} parent=1 // pred_check_branch
      %11 = sbr.rel (0) target = $region9
    $region8: #{pairwise_iou.1} parent=1 // pred_region
      _
    $region9: #{pairwise_iou.1} parent=1 // pred_fallthru
      _
    %v12 = vld [vmem:[%s0] sm:$0xff]
    %v13 = vld [vmem:[%s1] sm:$0xff]
    %15 = vrot.lane.b32.xlu0 %v12, 2
    %v16 = vpop.permute.xlu0 %15
    %v18 = vsub.f32 %v12, %v16
    %20 = vrot.lane.b32.xlu0 %v18, 127
    %v21 = vpop.permute.xlu0 %20
    %v23 = vmul.f32 %v18, %v21
    %24 = vset.pattern.permute.xlu0 2
    %25 = vperm.xlu0 %24, %v12
    %v26 = vpop.permute.xlu0 %25
    %v28 = vlaneseq
    %v29 = vshrl.u32 %v28, 7
    %v30 = vsub.s32 2, %v29
    %v31 = vrot.slane %v13, %v30
    %v32 = vmin.f32 %v26, %v31
    %33 = vset.pattern.permute.xlu0 0
    %34 = vperm.xlu0 %33, %v12
    %v35 = vpop.permute.xlu0 %34
    %v37 = vlaneseq
    %v38 = vshrl.u32 %v37, 7
    %v39 = vsub.s32 0, %v38
    %v40 = vrot.slane %v13, %v39
    %v41 = vmax.f32 %v35, %v40
    %v42 = vsub.f32 %v32, %v41
    %43 = vset.pattern.permute.xlu0 3
    %44 = vperm.xlu0 %43, %v12
    %v45 = vpop.permute.xlu0 %44
    %v47 = vlaneseq
    %v48 = vshrl.u32 %v47, 7
    %v49 = vsub.s32 3, %v48
    %v50 = vrot.slane %v13, %v49
    %v51 = vmin.f32 %v45, %v50
    %52 = vset.pattern.permute.xlu0 1
    %53 = vperm.xlu0 %52, %v12
    %v54 = vpop.permute.xlu0 %53
    %v56 = vlaneseq
    %v57 = vshrl.u32 %v56, 7
    %v58 = vsub.s32 1, %v57
    %v59 = vrot.slane %v13, %v58
    %v60 = vmax.f32 %v54, %v59
    %v61 = vsub.f32 %v51, %v60
    %v62 = vmax.f32 %v42, 0.0
    %v63 = vmax.f32 %v61, 0.0
    %v64 = vmul.f32 %v62, %v63
    %66 = vset.pattern.permute.xlu0 2
    %67 = vperm.xlu0 %66, %v23
    %v68 = vpop.permute.xlu0 %67
    %v70 = vlaneseq
    %v71 = vshrl.u32 %v70, 7
    %v72 = vsub.s32 4, %v71
    %v73 = vrot.slane %v13, %v72
    %v74 = vadd.f32 %v68, %v73
    %v75 = vsub.f32 %v74, %v64
    %v76 = vmax.f32 %v75, 1e-08
    %v77 = vrcp.pop %v76
    %v78 = vmul.f32 %v76, %v77
    %v79 = vsub.f32 2.0, %v78
    %v80 = vmul.f32 %v77, %v79
    %v81 = vmul.f32 %v64, %v80
    %82 = vst [vmem:[#allocation2] sm:$0xff] %v81
    // Predicated region
    $region10: #{pairwise_iou.1} parent=1 // pred_check
      _
    $region11: #{pairwise_iou.1} parent=1 // pred_check_branch
      %84 = sbr.rel (0) target = $region13
    $region12: #{pairwise_iou.1} parent=1 // pred_region
      %s86 = ssub.s32 128, 128
      %87 = vsyncadd [#allocation3], %s86
      %s89 = sshll.u32 [#allocation2], 4
      %s90 = int_to_ptr.vmem [resolvable:$true] %s89
      %92 = dma.vmem_to_hbm [thread:$0]  %s90, 128, %s2, [#allocation3]
    $region13: #{pairwise_iou.1} parent=1 // pred_fallthru
      _
    // Predicated region
    $region14: #{pairwise_iou.1} parent=1 // pred_check
      _
    $region15: #{pairwise_iou.1} parent=1 // pred_check_branch
      %94 = sbr.rel (0) target = $region17
    $region16: #{pairwise_iou.1} parent=1 // pred_region
      %95 = dma.done [#allocation3], 128
    $region17: #{pairwise_iou.1} parent=1 // pred_fallthru
      _
    %96 = vsyncpa [#allocation3], 1

</llo_original>
